<compile_context>
chip_gen: v6e
topology: v6e:2x2x1
jax: 0.10.0
libtpu: 0.0.40
codegen_flags: <defaults>
</compile_context>

<pallas_src>
import functools

import jax
import jax.numpy as jnp
import numpy as np
from jax.experimental import pallas as pl
from jax.experimental.pallas import tpu as pltpu


_INV_SQRT2 = 0.7071067811865476


def _gelu_erf(x):
    """erf-based GELU matching F.gelu's default to ~1.5e-7 abs error.

    erf is the Abramowitz-Stegun 7.1.26 rational approximation.  The single
    divide is lowered to an EUP approximate reciprocal plus one Newton-Raphson
    refinement (2 VALU ops), keeping full f32 accuracy while taking the divide
    off the saturating VALU slot.
    """
    z = x * _INV_SQRT2
    a = jnp.abs(z)
    d = 1.0 + 0.3275911 * a
    t0 = pl.reciprocal(d, approx=True)          # EUP slot (free here)
    t = t0 * (2.0 - d * t0)                     # one NR step -> ~f32 accurate
    poly = t * (0.254829592 + t * (-0.284496736 + t * (1.421413741
               + t * (-1.453152027 + t * 1.061405429))))
    erf_a = 1.0 - poly * jnp.exp(-(a * a))      # exp on EUP
    erf_z = jnp.where(z >= 0.0, erf_a, -erf_a)
    return 0.5 * x * (1.0 + erf_z)


def _embedding_block_kernel(x_ref, iota_ref, wf_ref, wx_ref, out_ref):
    """One row-tile of the fused embedding-gather + linear + gelu.

    x_ref   : (TN, F)      raw atom rows; column 0 holds the atom-type index
    iota_ref: (TN, vocab)  hoisted column iota (replicated, DMA'd once)
    wf_ref  : (vocab, H)   folded  embedding_table @ W_emb  +  bias
    wx_ref  : (F, H)       [zeros(1,H); W_feat]  (zero row nulls the index col)
    out_ref : (TN, H)
    """
    xt = x_ref[...]                                      # (TN, F) f32
    idx = xt[:, 0:1].astype(jnp.int32)                   # (TN, 1)

    # Embedding lookup (and bias) as a one-hot matmul on the MXU:
    #   onehot(idx) @ (table @ W_emb + b) == table[idx] @ W_emb + b
    onehot = (iota_ref[...] == idx).astype(jnp.float32)  # (TN, vocab)

    h = jnp.dot(onehot, wf_ref[...], preferred_element_type=jnp.float32)
    h = h + jnp.dot(xt, wx_ref[...], preferred_element_type=jnp.float32)

    out_ref[...] = _gelu_erf(h).astype(out_ref.dtype)


def _pick_tile_n(n):
    """Largest tile in {1024,512,256,128} that keeps >= 8 grid steps."""
    for t in (1024, 512, 256, 128):
        if pl.cdiv(n, t) >= 8:
            return t
    return 128


@functools.partial(jax.jit, static_argnames=("tile_n", "out_dtype"))
def embedding_block_forward(x, params, *, tile_n=None, out_dtype=jnp.float32):
    """x: (N, num_atom_features) f32 (col 0 = atom type index), or (N,) indices.

    params: {"embedding": (vocab, emb_dim), "w": (emb_dim + F - 1, hidden),
             "b": (hidden,)}   (w is the transpose of nn.Linear.weight)
    """
    if x.ndim == 1:                                      # mirror x.unsqueeze(1)
        x = x[:, None]
    n, f = x.shape
    if tile_n is None:
        tile_n = _pick_tile_n(n)

    table = params["embedding"].astype(jnp.float32)      # (vocab, emb_dim)
    w = params["w"].astype(jnp.float32)                  # (emb_dim + f - 1, H)
    b = params["b"].astype(jnp.float32)                  # (H,)
    vocab, emb_dim = table.shape
    hidden = w.shape[1]

    # Fold embedding table AND bias into one (vocab, hidden) matrix (tiny,
    # done once per call by XLA, full f32 precision).
    wf = jnp.dot(table, w[:emb_dim, :],
                 preferred_element_type=jnp.float32,
                 precision=jax.lax.Precision.HIGHEST) + b[None, :]
    # Feature slice of the linear with a zero first row so x's index column
    # contributes exactly nothing (idx * 0.0 == 0.0).
    wx = jnp.concatenate([jnp.zeros((1, hidden), jnp.float32), w[emb_dim:, :]],
                         axis=0)

    # Hoisted one-hot iota (replicated input, DMA'd once, reused every step).
    iota = jax.lax.broadcasted_iota(jnp.int32, (tile_n, vocab), 1)

    # Pad only the per-row input (cheap); padded rows use idx 0 (valid) and
    # are sliced off below.
    n_pad = pl.cdiv(n, tile_n) * tile_n
    xp = jnp.pad(x.astype(jnp.float32), ((0, n_pad - n), (0, 0)))
    grid = (n_pad // tile_n,)

    cost = pl.CostEstimate(
        flops=2 * n_pad * (vocab + f) * hidden,
        transcendentals=2 * n_pad * hidden,               # exp + reciprocal
        bytes_accessed=4 * (n_pad * f + n_pad * hidden
                            + vocab * hidden + f * hidden + tile_n * vocab),
    )

    rep = lambda i: (0, 0)  # replicated (VMEM-resident) operands
    out = pl.pallas_call(
        _embedding_block_kernel,
        out_shape=jax.ShapeDtypeStruct((n_pad, hidden), out_dtype),
        grid_spec=pltpu.PrefetchScalarGridSpec(
            num_scalar_prefetch=0,
            grid=grid,
            in_specs=[
                pl.BlockSpec((tile_n, f), lambda i: (i, 0)),   # x row tile
                pl.BlockSpec((tile_n, vocab), rep),            # hoisted iota
                pl.BlockSpec((vocab, hidden), rep),            # table@W_emb + b
                pl.BlockSpec((f, hidden), rep),                # zero-padded W_feat
            ],
            out_specs=pl.BlockSpec((tile_n, hidden), lambda i: (i, 0)),
        ),
        compiler_params=pltpu.CompilerParams(
            dimension_semantics=("parallel",),
            vmem_limit_bytes=32 * 1024 * 1024,
        ),
        cost_estimate=cost,
    )(xp, iota, wf, wx)

    return out[:n]


def _reference(x, params):
    """Pure-JAX mirror of the PyTorch forward (gather -> concat -> linear -> gelu)."""
    if x.ndim == 1:
        x = x[:, None]
    table, w, b = params["embedding"], params["w"], params["b"]
    idx = x[:, 0].astype(jnp.int32)
    emb = table[idx]
    concat = jnp.concatenate([emb, x[:, 1:]], axis=-1)
    h = concat @ w + b
    return jax.nn.gelu(h, approximate=False)             # erf-based gelu


if __name__ == "__main__":
    # Small deterministic problem, consistent with the module:
    #   embedding_size = {'atom': 20}, embedding_dimension = 32,
    #   num_atom_features = 8, hidden_channels = 128, N = 1000 atoms.
    vocab, emb_dim, num_atom_features, hidden, n = 20, 32, 8, 128, 1000
    f_in = emb_dim + num_atom_features - 1

    key = jax.random.PRNGKey(0)
    k1, k2, k3, k4, k5 = jax.random.split(key, 5)

    atom_types = jax.random.randint(k1, (n,), 0, vocab).astype(jnp.float32)
    feats = jax.random.normal(k2, (n, num_atom_features - 1), jnp.float32)
    x = jnp.concatenate([atom_types[:, None], feats], axis=-1)  # (N, 8)

    params = {
        "embedding": jax.random.normal(k3, (vocab, emb_dim), jnp.float32) * 0.1,
        "w": jax.random.normal(k4, (f_in, hidden), jnp.float32)
             * (1.0 / np.sqrt(f_in)),
        "b": jax.random.normal(k5, (hidden,), jnp.float32) * 0.1,
    }

    out = embedding_block_forward(x, params)
    out = jax.block_until_ready(out)

    ref = _reference(x, params)
    np.testing.assert_allclose(np.asarray(out), np.asarray(ref),
                               rtol=1e-4, atol=1e-5)

    print("KERNEL_OK")
</pallas_src>

<mosaic_0001>
module attributes {stable_mosaic.version = 11 : i64} {
  func.func @_embedding_block_kernel(%arg0: i32, %arg1: memref<128x8xf32, #tpu.memory_space<vmem>>, %arg2: memref<128x20xi32, #tpu.memory_space<vmem>>, %arg3: memref<20x128xf32, #tpu.memory_space<vmem>>, %arg4: memref<8x128xf32, #tpu.memory_space<vmem>>, %arg5: memref<128x128xf32, #tpu.memory_space<vmem>>) attributes {dimension_semantics = [#tpu.dimension_semantics<parallel>], iteration_bounds = array<i64: 8>, scalar_prefetch = 0 : i64, scratch_operands = 0 : i64, tpu.core_type = #tpu.core_type<tc>, window_params = [{transform_indices = @transform_0, window_bounds = array<i64: 128, 8>}, {pipeline_mode = #tpu.pipeline_mode<synchronous>, transform_indices = @transform_1, window_bounds = array<i64: 128, 20>}, {pipeline_mode = #tpu.pipeline_mode<synchronous>, transform_indices = @transform_2, window_bounds = array<i64: 20, 128>}, {pipeline_mode = #tpu.pipeline_mode<synchronous>, transform_indices = @transform_3, window_bounds = array<i64: 8, 128>}, {transform_indices = @transform_4, window_bounds = array<i64: 128, 128>}]} {
    %c0 = arith.constant 0 : index
    %c0_0 = arith.constant 0 : index
    %0 = vector.load %arg1[%c0, %c0_0] : memref<128x8xf32, #tpu.memory_space<vmem>>, vector<128x8xf32>
    %1 = vector.extract_strided_slice %0 {offsets = [0, 0], sizes = [128, 1], strides = [1, 1]} : vector<128x8xf32> to vector<128x1xf32>
    %2 = arith.fptosi %1 : vector<128x1xf32> to vector<128x1xi32>
    %c0_1 = arith.constant 0 : index
    %c0_2 = arith.constant 0 : index
    %3 = vector.load %arg2[%c0_1, %c0_2] : memref<128x20xi32, #tpu.memory_space<vmem>>, vector<128x20xi32>
    %4 = vector.broadcast %2 : vector<128x1xi32> to vector<128x20xi32>
    %5 = arith.cmpi eq, %3, %4 : vector<128x20xi32>
    %6 = arith.extui %5 : vector<128x20xi1> to vector<128x20xi32>
    %7 = arith.sitofp %6 : vector<128x20xi32> to vector<128x20xf32>
    %c0_3 = arith.constant 0 : index
    %c0_4 = arith.constant 0 : index
    %8 = vector.load %arg3[%c0_3, %c0_4] : memref<20x128xf32, #tpu.memory_space<vmem>>, vector<20x128xf32>
    %cst = arith.constant dense<0.000000e+00> : vector<128x128xf32>
    %9 = tpu.matmul %7, %8, %cst {dimension_numbers = #tpu.dot_dimension_numbers<[1], [0], [0], [1], [0, 0, 1, 1], [], []>} : vector<128x20xf32>, vector<20x128xf32>, vector<128x128xf32> -> vector<128x128xf32>
    %c0_5 = arith.constant 0 : index
    %c0_6 = arith.constant 0 : index
    %10 = vector.load %arg4[%c0_5, %c0_6] : memref<8x128xf32, #tpu.memory_space<vmem>>, vector<8x128xf32>
    %cst_7 = arith.constant dense<0.000000e+00> : vector<128x128xf32>
    %11 = tpu.matmul %0, %10, %cst_7 {dimension_numbers = #tpu.dot_dimension_numbers<[1], [0], [0], [1], [0, 0, 1, 1], [], []>} : vector<128x8xf32>, vector<8x128xf32>, vector<128x128xf32> -> vector<128x128xf32>
    %12 = arith.addf %9, %11 : vector<128x128xf32>
    %cst_8 = arith.constant 0.707106769 : f32
    %13 = vector.broadcast %cst_8 : f32 to vector<128x128xf32>
    %14 = arith.mulf %12, %13 : vector<128x128xf32>
    %15 = math.absf %14 : vector<128x128xf32>
    %cst_9 = arith.constant 0.327591091 : f32
    %16 = vector.broadcast %cst_9 : f32 to vector<128x128xf32>
    %17 = arith.mulf %16, %15 : vector<128x128xf32>
    %cst_10 = arith.constant 1.000000e+00 : f32
    %18 = vector.broadcast %cst_10 : f32 to vector<128x128xf32>
    %19 = arith.addf %18, %17 : vector<128x128xf32>
    %20 = tpu.reciprocal %19 {approx = true} : vector<128x128xf32> -> vector<128x128xf32>
    %21 = arith.mulf %19, %20 : vector<128x128xf32>
    %cst_11 = arith.constant 2.000000e+00 : f32
    %22 = vector.broadcast %cst_11 : f32 to vector<128x128xf32>
    %23 = arith.subf %22, %21 : vector<128x128xf32>
    %24 = arith.mulf %20, %23 : vector<128x128xf32>
    %cst_12 = arith.constant 1.06140542 : f32
    %25 = vector.broadcast %cst_12 : f32 to vector<128x128xf32>
    %26 = arith.mulf %24, %25 : vector<128x128xf32>
    %cst_13 = arith.constant -1.45315206 : f32
    %27 = vector.broadcast %cst_13 : f32 to vector<128x128xf32>
    %28 = arith.addf %27, %26 : vector<128x128xf32>
    %29 = arith.mulf %24, %28 : vector<128x128xf32>
    %cst_14 = arith.constant 1.42141378 : f32
    %30 = vector.broadcast %cst_14 : f32 to vector<128x128xf32>
    %31 = arith.addf %30, %29 : vector<128x128xf32>
    %32 = arith.mulf %24, %31 : vector<128x128xf32>
    %cst_15 = arith.constant -0.284496725 : f32
    %33 = vector.broadcast %cst_15 : f32 to vector<128x128xf32>
    %34 = arith.addf %33, %32 : vector<128x128xf32>
    %35 = arith.mulf %24, %34 : vector<128x128xf32>
    %cst_16 = arith.constant 0.254829586 : f32
    %36 = vector.broadcast %cst_16 : f32 to vector<128x128xf32>
    %37 = arith.addf %36, %35 : vector<128x128xf32>
    %38 = arith.mulf %24, %37 : vector<128x128xf32>
    %39 = arith.mulf %15, %15 : vector<128x128xf32>
    %cst_17 = arith.constant 0.000000e+00 : f32
    %40 = vector.broadcast %cst_17 : f32 to vector<128x128xf32>
    %41 = arith.subf %40, %39 : vector<128x128xf32>
    %42 = math.exp %41 : vector<128x128xf32>
    %43 = arith.mulf %38, %42 : vector<128x128xf32>
    %cst_18 = arith.constant 1.000000e+00 : f32
    %44 = vector.broadcast %cst_18 : f32 to vector<128x128xf32>
    %45 = arith.subf %44, %43 : vector<128x128xf32>
    %cst_19 = arith.constant 0.000000e+00 : f32
    %46 = vector.broadcast %cst_19 : f32 to vector<128x128xf32>
    %47 = arith.cmpf oge, %14, %46 : vector<128x128xf32>
    %cst_20 = arith.constant 0.000000e+00 : f32
    %48 = vector.broadcast %cst_20 : f32 to vector<128x128xf32>
    %49 = arith.subf %48, %45 : vector<128x128xf32>
    %50 = arith.select %47, %45, %49 : vector<128x128xi1>, vector<128x128xf32>
    %cst_21 = arith.constant 5.000000e-01 : f32
    %51 = vector.broadcast %cst_21 : f32 to vector<128x128xf32>
    %52 = arith.mulf %51, %12 : vector<128x128xf32>
    %cst_22 = arith.constant 1.000000e+00 : f32
    %53 = vector.broadcast %cst_22 : f32 to vector<128x128xf32>
    %54 = arith.addf %53, %50 : vector<128x128xf32>
    %55 = arith.mulf %52, %54 : vector<128x128xf32>
    %c0_23 = arith.constant 0 : index
    %c0_24 = arith.constant 0 : index
    %56 = vector.load %arg5[%c0_23, %c0_24] : memref<128x128xf32, #tpu.memory_space<vmem>>, vector<128x128xf32>
    tpu.vector_store %arg5[%c0_23, %c0_24], %55 {strides = array<i32>} : memref<128x128xf32, #tpu.memory_space<vmem>>, vector<128x128xf32>,
    return
  }
  func.func @transform_0(%arg0: i32) -> (i32, i32) {
    %c0_i32 = arith.constant 0 : i32
    %c0_i32_0 = arith.constant 0 : i32
    return %arg0, %c0_i32 : i32, i32
  }
  func.func @transform_1(%arg0: i32) -> (i32, i32) {
    %c0_i32 = arith.constant 0 : i32
    %c0_i32_0 = arith.constant 0 : i32
    %c0_i32_1 = arith.constant 0 : i32
    return %c0_i32, %c0_i32_0 : i32, i32
  }
  func.func @transform_2(%arg0: i32) -> (i32, i32) {
    %c0_i32 = arith.constant 0 : i32
    %c0_i32_0 = arith.constant 0 : i32
    %c0_i32_1 = arith.constant 0 : i32
    return %c0_i32, %c0_i32_0 : i32, i32
  }
  func.func @transform_3(%arg0: i32) -> (i32, i32) {
    %c0_i32 = arith.constant 0 : i32
    %c0_i32_0 = arith.constant 0 : i32
    %c0_i32_1 = arith.constant 0 : i32
    return %c0_i32, %c0_i32_0 : i32, i32
  }
  func.func @transform_4(%arg0: i32) -> (i32, i32) {
    %c0_i32 = arith.constant 0 : i32
    %c0_i32_0 = arith.constant 0 : i32
    return %arg0, %c0_i32 : i32, i32
  }
}

</mosaic_0001>

<llo_original>
// kernel: embedding_block_forward.1
$region0: #{embedding_block_forward.1}
  #allocation0 [shape = 'u32[]', space=smem, size = 0x4, offset = 0x4, fixed_abs, tag = 'smem constant byte address 0x4 - core index']
  #allocation1 [shape = 'u32[144,128]{1,0:T(1,128)}', space=vmem, size = 0x12000, scoped, tag = 'internal scratch']
  %s0 = inlined_call_operand.vmem [shape: f32[1024,8], index: 0, kind: input, shape index: {}]
  %s1 = inlined_call_operand.vmem [shape: s32[128,20], index: 1, kind: input, shape index: {}]
  %s2 = inlined_call_operand.vmem [shape: f32[20,128], index: 2, kind: input, shape index: {}]
  %s3 = inlined_call_operand.vmem [shape: f32[8,128], index: 3, kind: input, shape index: {}]
  %s4 = inlined_call_operand.vmem [shape: f32[1024,128], index: 4, kind: output, shape index: {}]
  %s5 = sld [smem:[#allocation0]]
  $region49: #{embedding_block_forward.1} parent=0
    _
  %s7 = ssub.s32 1, %s5
  %s8 = scalar_select 0, %s7, %s5
  loop: start=0, step=1, limit=10
  $region2: #{embedding_block_forward.1} parent=0 // loop_pre_header
    _
  $region3: #{embedding_block_forward.1} parent=0 // loop_header
    %s10 = sphi 0, %s14
    %p11 = scmp.ge.s32.totalorder %s10, 10
    %s20 = sphi 0, %s22
    %s23 = sphi 0, %s20
    %s24 = sphi 0, %s23
    %s40 = sphi 0, %s24
    %s44 = sphi 0, %s44
    %s46 = sphi 0, %s44
    %s47 = sphi 0, %s46
    %s61 = sphi 0, %s47
    %s65 = sphi 0, %s65
    %s67 = sphi 0, %s65
    %s68 = sphi 0, %s67
    %s82 = sphi 0, %s68
    %s86 = sphi 0, %s86
    %s88 = sphi 0, %s86
    %s89 = sphi 0, %s88
    %s103 = sphi 0, %s89
    %s109 = sphi 0, %s111
    %s112 = sphi 0, %s109
    %s113 = sphi 0, %s112
    %s129 = sphi 0, %s113
  $region4: #{embedding_block_forward.1} parent=0 // loop_header_branch
    %13 = sbr.rel (%p11) target = $region8
  $region5: #{embedding_block_forward.1} parent=0 // loop_body
    %s15 = ssub.s32 %s10, 1
    %s16 = ssub.s32 %s10, 2
    %s17 = sadd.s32 %s10, 1
    %s18 = ssub.s32 %s10, %s17
    %p19 = scmp.eq.s32.totalorder %s18, 0
    %s21 = sadd.s32 %s20, 1
    %s22 = scalar_select %p19, %s20, %s21
    %p25 = pneg %p19
    %p26 = scmp.eq.s32.totalorder %s10, 7
    %p27 = por %p25, %p26
    %p28 = scmp.ne.s32.totalorder %s20, %s23
    %p29 = scmp.eq.s32.totalorder %s10, 0
    %p30 = por %p28, %p29
    %p31 = scmp.ne.s32.totalorder %s20, %s23
    %p32 = scmp.eq.s32.totalorder %s15, 7
    %p33 = por %p31, %p32
    %p34 = scmp.ne.s32.totalorder %s23, %s24
    %p35 = scmp.eq.s32.totalorder %s15, 0
    %p36 = por %p34, %p35
    %p37 = scmp.ne.s32.totalorder %s23, %s24
    %p38 = scmp.eq.s32.totalorder %s16, 7
    %p39 = por %p37, %p38
    %p41 = scmp.ne.s32.totalorder %s24, %s40
    %p42 = scmp.eq.s32.totalorder %s16, 0
    %p43 = por %p41, %p42
    %s45 = sadd.s32 %s44, 1
    %p48 = scmp.eq.s32.totalorder %s10, 7
    %p49 = scmp.ne.s32.totalorder %s44, %s46
    %p50 = scmp.eq.s32.totalorder %s10, 0
    %p51 = por %p49, %p50
    %p52 = scmp.ne.s32.totalorder %s44, %s46
    %p53 = scmp.eq.s32.totalorder %s15, 7
    %p54 = por %p52, %p53
    %p55 = scmp.ne.s32.totalorder %s46, %s47
    %p56 = scmp.eq.s32.totalorder %s15, 0
    %p57 = por %p55, %p56
    %p58 = scmp.ne.s32.totalorder %s46, %s47
    %p59 = scmp.eq.s32.totalorder %s16, 7
    %p60 = por %p58, %p59
    %p62 = scmp.ne.s32.totalorder %s47, %s61
    %p63 = scmp.eq.s32.totalorder %s16, 0
    %p64 = por %p62, %p63
    %s66 = sadd.s32 %s65, 1
    %p69 = scmp.eq.s32.totalorder %s10, 7
    %p70 = scmp.ne.s32.totalorder %s65, %s67
    %p71 = scmp.eq.s32.totalorder %s10, 0
    %p72 = por %p70, %p71
    %p73 = scmp.ne.s32.totalorder %s65, %s67
    %p74 = scmp.eq.s32.totalorder %s15, 7
    %p75 = por %p73, %p74
    %p76 = scmp.ne.s32.totalorder %s67, %s68
    %p77 = scmp.eq.s32.totalorder %s15, 0
    %p78 = por %p76, %p77
    %p79 = scmp.ne.s32.totalorder %s67, %s68
    %p80 = scmp.eq.s32.totalorder %s16, 7
    %p81 = por %p79, %p80
    %p83 = scmp.ne.s32.totalorder %s68, %s82
    %p84 = scmp.eq.s32.totalorder %s16, 0
    %p85 = por %p83, %p84
    %s87 = sadd.s32 %s86, 1
    %p90 = scmp.eq.s32.totalorder %s10, 7
    %p91 = scmp.ne.s32.totalorder %s86, %s88
    %p92 = scmp.eq.s32.totalorder %s10, 0
    %p93 = por %p91, %p92
    %p94 = scmp.ne.s32.totalorder %s86, %s88
    %p95 = scmp.eq.s32.totalorder %s15, 7
    %p96 = por %p94, %p95
    %p97 = scmp.ne.s32.totalorder %s88, %s89
    %p98 = scmp.eq.s32.totalorder %s15, 0
    %p99 = por %p97, %p98
    %p100 = scmp.ne.s32.totalorder %s88, %s89
    %p101 = scmp.eq.s32.totalorder %s16, 7
    %p102 = por %p100, %p101
    %p104 = scmp.ne.s32.totalorder %s89, %s103
    %p105 = scmp.eq.s32.totalorder %s16, 0
    %p106 = por %p104, %p105
    %s107 = ssub.s32 %s10, %s17
    %p108 = scmp.eq.s32.totalorder %s107, 0
    %s110 = sadd.s32 %s109, 1
    %s111 = scalar_select %p108, %s109, %s110
    %p114 = pneg %p108
    %p115 = scmp.eq.s32.totalorder %s10, 7
    %p116 = por %p114, %p115
    %p117 = scmp.ne.s32.totalorder %s109, %s112
    %p118 = scmp.eq.s32.totalorder %s10, 0
    %p119 = por %p117, %p118
    %p120 = scmp.ne.s32.totalorder %s109, %s112
    %p121 = scmp.eq.s32.totalorder %s15, 7
    %p122 = por %p120, %p121
    %p123 = scmp.ne.s32.totalorder %s112, %s113
    %p124 = scmp.eq.s32.totalorder %s15, 0
    %p125 = por %p123, %p124
    %p126 = scmp.ne.s32.totalorder %s112, %s113
    %p127 = scmp.eq.s32.totalorder %s16, 7
    %p128 = por %p126, %p127
    %p130 = scmp.ne.s32.totalorder %s113, %s129
    %p131 = scmp.eq.s32.totalorder %s16, 0
    %p132 = por %p130, %p131
    %p133 = scmp.le.s32.totalorder 1, %s10
    %p134 = scmp.lt.s32.totalorder %s10, 9
    %p135 = pnand %p133, %p134
    %p136 = pneg %p135
    // Predicated region
    $region9: #{embedding_block_forward.1} parent=5 // pred_check
      _
    $region10: #{embedding_block_forward.1} parent=5 // pred_check_branch
      %138 = sbr.rel (%p135) target = $region12
    $region11: #{embedding_block_forward.1} parent=5 // pred_region
      %s139 = ssub.s32 %s10, 1
      // Predicated region
      $region13: #{embedding_block_forward.1} parent=11 // pred_check
        %p140 = pneg %p57
      $region14: #{embedding_block_forward.1} parent=11 // pred_check_branch
        %142 = sbr.rel (%p140) target = $region16
      $region15: #{embedding_block_forward.1} parent=11 // pred_region
        _
      $region16: #{embedding_block_forward.1} parent=11 // pred_fallthru
        _
      // Predicated region
      $region17: #{embedding_block_forward.1} parent=11 // pred_check
        %p143 = pneg %p78
      $region18: #{embedding_block_forward.1} parent=11 // pred_check_branch
        %145 = sbr.rel (%p143) target = $region20
      $region19: #{embedding_block_forward.1} parent=11 // pred_region
        _
      $region20: #{embedding_block_forward.1} parent=11 // pred_fallthru
        _
      // Predicated region
      $region21: #{embedding_block_forward.1} parent=11 // pred_check
        %p146 = pneg %p99
      $region22: #{embedding_block_forward.1} parent=11 // pred_check_branch
        %148 = sbr.rel (%p146) target = $region24
      $region23: #{embedding_block_forward.1} parent=11 // pred_region
        _
      $region24: #{embedding_block_forward.1} parent=11 // pred_fallthru
        _
    $region12: #{embedding_block_forward.1} parent=5 // pred_fallthru
      _
    %p149 = scmp.lt.s32.totalorder %s10, 8
    // Predicated region
    $region25: #{embedding_block_forward.1} parent=5 // pred_check
      %p150 = pneg %p149
    $region26: #{embedding_block_forward.1} parent=5 // pred_check_branch
      %152 = sbr.rel (%p150) target = $region28
    $region27: #{embedding_block_forward.1} parent=5 // pred_region
      // Predicated region
      $region29: #{embedding_block_forward.1} parent=27 // pred_check
        %p153 = pneg %p30
      $region30: #{embedding_block_forward.1} parent=27 // pred_check_branch
        %155 = sbr.rel (%p153) target = $region32
      $region31: #{embedding_block_forward.1} parent=27 // pred_region
        %s156 = smul.u32 16, %s10
        %p157 = scmp.lt.s32.totalorder %s156, 127
        %s158 = scalar_select %p157, %s156, 127
        %s159 = smul.addr %s158, 8
        %s160 = scalar_lea.vmem %s0, %s159
        %s161 = smul.u32 16, %s10
      $region32: #{embedding_block_forward.1} parent=27 // pred_fallthru
        _
    $region28: #{embedding_block_forward.1} parent=5 // pred_fallthru
      _
    %p162 = scmp.le.s32.totalorder 1, %s10
    %p163 = scmp.lt.s32.totalorder %s10, 9
    %p164 = pnand %p162, %p163
    %p165 = pneg %p164
    // Predicated region
    $region33: #{embedding_block_forward.1} parent=5 // pred_check
      _
    $region34: #{embedding_block_forward.1} parent=5 // pred_check_branch
      %167 = sbr.rel (%p164) target = $region36
    $region35: #{embedding_block_forward.1} parent=5 // pred_region
      %s168 = ssub.s32 %s10, 1
      %s169 = smul.u32 16, %s15
      %p170 = scmp.lt.s32.totalorder %s169, 127
      %s171 = scalar_select %p170, %s169, 127
      %s172 = smul.addr %s171, 8
      %s173 = scalar_lea.vmem %s0, %s172
      %p174 = pneg %p36
      %p175 = pneg %p33
      %p176 = pneg %p57
      %p177 = pneg %p54
      %p178 = pneg %p78
      %p179 = pneg %p75
      %p180 = pneg %p99
      %p181 = pneg %p96
      %p182 = pneg %p125
      %p183 = pneg %p122
      %s184 = smul.u32 16, %s15
      %p185 = scmp.lt.s32.totalorder %s184, 127
      %s186 = scalar_select %p185, %s184, 127
      %s187 = smul.addr %s186, 8
      %s188 = scalar_lea.vmem %s4, %s187
      %s189 = smul.u32 16, %s15
      %p190 = scmp.lt.s32.totalorder %s189, 127
      %s191 = scalar_select %p190, %s189, 127
      %s192 = smul.addr %s191, 8
      %s193 = scalar_lea.vmem %s0, %s192
      %s194 = smul.u32 16, %s15
      %s195 = smul.u32 16, %s15
      %p196 = scmp.lt.s32.totalorder %s195, 127
      %s197 = scalar_select %p196, %s195, 127
      %s198 = smul.addr %s197, 8
      %s199 = scalar_lea.vmem %s4, %s198
      %s200 = smul.u32 16, %s15
      %v201 = vld [vmem:[%s193] sm:$0xff]
      %v202 = vld [vmem:[%s193 + $0x8] sm:$0xff]
      %v203 = vld [vmem:[%s193 + $0x10] sm:$0xff]
      %v204 = vld [vmem:[%s193 + $0x18] sm:$0xff]
      %v205 = vld [vmem:[%s193 + $0x20] sm:$0xff]
      %v206 = vld [vmem:[%s193 + $0x28] sm:$0xff]
      %v207 = vld [vmem:[%s193 + $0x30] sm:$0xff]
      %v208 = vld [vmem:[%s193 + $0x38] sm:$0xff]
      %v209 = vld [vmem:[%s193 + $0x40] sm:$0xff]
      %v210 = vld [vmem:[%s193 + $0x48] sm:$0xff]
      %v211 = vld [vmem:[%s193 + $0x50] sm:$0xff]
      %v212 = vld [vmem:[%s193 + $0x58] sm:$0xff]
      %v213 = vld [vmem:[%s193 + $0x60] sm:$0xff]
      %v214 = vld [vmem:[%s193 + $0x68] sm:$0xff]
      %v215 = vld [vmem:[%s193 + $0x70] sm:$0xff]
      %v216 = vld [vmem:[%s193 + $0x78] sm:$0xff]
      %v217 = vcvt.f32.s32.to.zero.pseudo %v201
      %v218 = vcvt.f32.s32.to.zero.pseudo %v202
      %v219 = vcvt.f32.s32.to.zero.pseudo %v203
      %v220 = vcvt.f32.s32.to.zero.pseudo %v204
      %v221 = vcvt.f32.s32.to.zero.pseudo %v205
      %v222 = vcvt.f32.s32.to.zero.pseudo %v206
      %v223 = vcvt.f32.s32.to.zero.pseudo %v207
      %v224 = vcvt.f32.s32.to.zero.pseudo %v208
      %v225 = vcvt.f32.s32.to.zero.pseudo %v209
      %v226 = vcvt.f32.s32.to.zero.pseudo %v210
      %v227 = vcvt.f32.s32.to.zero.pseudo %v211
      %v228 = vcvt.f32.s32.to.zero.pseudo %v212
      %v229 = vcvt.f32.s32.to.zero.pseudo %v213
      %v230 = vcvt.f32.s32.to.zero.pseudo %v214
      %v231 = vcvt.f32.s32.to.zero.pseudo %v215
      %v232 = vcvt.f32.s32.to.zero.pseudo %v216
      %v233 = vld [vmem:[%s1] sm:$0xff]
      %v234 = vld [vmem:[%s1 + $0x8] sm:$0xff]
      %v235 = vld [vmem:[%s1 + $0x10] sm:$0xff]
      %v236 = vld [vmem:[%s1 + $0x18] sm:$0xff]
      %v237 = vld [vmem:[%s1 + $0x20] sm:$0xff]
      %v238 = vld [vmem:[%s1 + $0x28] sm:$0xff]
      %v239 = vld [vmem:[%s1 + $0x30] sm:$0xff]
      %v240 = vld [vmem:[%s1 + $0x38] sm:$0xff]
      %v241 = vld [vmem:[%s1 + $0x40] sm:$0xff]
      %v242 = vld [vmem:[%s1 + $0x48] sm:$0xff]
      %v243 = vld [vmem:[%s1 + $0x50] sm:$0xff]
      %v244 = vld [vmem:[%s1 + $0x58] sm:$0xff]
      %v245 = vld [vmem:[%s1 + $0x60] sm:$0xff]
      %v246 = vld [vmem:[%s1 + $0x68] sm:$0xff]
      %v247 = vld [vmem:[%s1 + $0x70] sm:$0xff]
      %v248 = vld [vmem:[%s1 + $0x78] sm:$0xff]
      %249 = vset.pattern.permute.xlu0 0
      %250 = vperm.xlu0 %249, %v217
      %v251 = vpop.permute.xlu0 %250
      %252 = vset.pattern.permute.xlu0 0
      %253 = vperm.xlu0 %252, %v218
      %v254 = vpop.permute.xlu0 %253
      %255 = vset.pattern.permute.xlu0 0
      %256 = vperm.xlu0 %255, %v219
      %v257 = vpop.permute.xlu0 %256
      %258 = vset.pattern.permute.xlu0 0
      %259 = vperm.xlu0 %258, %v220
      %v260 = vpop.permute.xlu0 %259
      %261 = vset.pattern.permute.xlu0 0
      %262 = vperm.xlu0 %261, %v221
      %v263 = vpop.permute.xlu0 %262
      %264 = vset.pattern.permute.xlu0 0
      %265 = vperm.xlu0 %264, %v222
      %v266 = vpop.permute.xlu0 %265
      %267 = vset.pattern.permute.xlu0 0
      %268 = vperm.xlu0 %267, %v223
      %v269 = vpop.permute.xlu0 %268
      %270 = vset.pattern.permute.xlu0 0
      %271 = vperm.xlu0 %270, %v224
      %v272 = vpop.permute.xlu0 %271
      %273 = vset.pattern.permute.xlu0 0
      %274 = vperm.xlu0 %273, %v225
      %v275 = vpop.permute.xlu0 %274
      %276 = vset.pattern.permute.xlu0 0
      %277 = vperm.xlu0 %276, %v226
      %v278 = vpop.permute.xlu0 %277
      %279 = vset.pattern.permute.xlu0 0
      %280 = vperm.xlu0 %279, %v227
      %v281 = vpop.permute.xlu0 %280
      %282 = vset.pattern.permute.xlu0 0
      %283 = vperm.xlu0 %282, %v228
      %v284 = vpop.permute.xlu0 %283
      %285 = vset.pattern.permute.xlu0 0
      %286 = vperm.xlu0 %285, %v229
      %v287 = vpop.permute.xlu0 %286
      %288 = vset.pattern.permute.xlu0 0
      %289 = vperm.xlu0 %288, %v230
      %v290 = vpop.permute.xlu0 %289
      %291 = vset.pattern.permute.xlu0 0
      %292 = vperm.xlu0 %291, %v231
      %v293 = vpop.permute.xlu0 %292
      %294 = vset.pattern.permute.xlu0 0
      %295 = vperm.xlu0 %294, %v232
      %v296 = vpop.permute.xlu0 %295
      %vm297 = vcmp.eq.s32.totalorder %v233, %v251
      %vm298 = vcmp.eq.s32.totalorder %v234, %v254
      %vm299 = vcmp.eq.s32.totalorder %v235, %v257
      %vm300 = vcmp.eq.s32.totalorder %v236, %v260
      %vm301 = vcmp.eq.s32.totalorder %v237, %v263
      %vm302 = vcmp.eq.s32.totalorder %v238, %v266
      %vm303 = vcmp.eq.s32.totalorder %v239, %v269
      %vm304 = vcmp.eq.s32.totalorder %v240, %v272
      %vm305 = vcmp.eq.s32.totalorder %v241, %v275
      %vm306 = vcmp.eq.s32.totalorder %v242, %v278
      %vm307 = vcmp.eq.s32.totalorder %v243, %v281
      %vm308 = vcmp.eq.s32.totalorder %v244, %v284
      %vm309 = vcmp.eq.s32.totalorder %v245, %v287
      %vm310 = vcmp.eq.s32.totalorder %v246, %v290
      %vm311 = vcmp.eq.s32.totalorder %v247, %v293
      %vm312 = vcmp.eq.s32.totalorder %v248, %v296
      %v313 = vsel %vm297, 1, 0
      %v314 = vsel %vm298, 1, 0
      %v315 = vsel %vm299, 1, 0
      %v316 = vsel %vm300, 1, 0
      %v317 = vsel %vm301, 1, 0
      %v318 = vsel %vm302, 1, 0
      %v319 = vsel %vm303, 1, 0
      %v320 = vsel %vm304, 1, 0
      %v321 = vsel %vm305, 1, 0
      %v322 = vsel %vm306, 1, 0
      %v323 = vsel %vm307, 1, 0
      %v324 = vsel %vm308, 1, 0
      %v325 = vsel %vm309, 1, 0
      %v326 = vsel %vm310, 1, 0
      %v327 = vsel %vm311, 1, 0
      %v328 = vsel %vm312, 1, 0
      %v329 = vcvt.s32.f32 %v313
      %v330 = vcvt.s32.f32 %v314
      %v331 = vcvt.s32.f32 %v315
      %v332 = vcvt.s32.f32 %v316
      %v333 = vcvt.s32.f32 %v317
      %v334 = vcvt.s32.f32 %v318
      %v335 = vcvt.s32.f32 %v319
      %v336 = vcvt.s32.f32 %v320
      %v337 = vcvt.s32.f32 %v321
      %v338 = vcvt.s32.f32 %v322
      %v339 = vcvt.s32.f32 %v323
      %v340 = vcvt.s32.f32 %v324
      %v341 = vcvt.s32.f32 %v325
      %v342 = vcvt.s32.f32 %v326
      %v343 = vcvt.s32.f32 %v327
      %v344 = vcvt.s32.f32 %v328
      %v345 = vld [vmem:[%s2] sm:$0xff]
      %v346 = vld [vmem:[%s2 + $0x8] sm:$0xff]
      %v347 = vld [vmem:[%s2 + $0x10] sm:$0xf]
      %v348 = vld [vmem:[%s3] sm:$0xff]
      %vm349 = vcmask 64512
      %v351 = vsel %vm349, %v201, 0
      %v354 = vsel %vm349, %v202, 0
      %v357 = vsel %vm349, %v203, 0
      %v360 = vsel %vm349, %v204, 0
      %v363 = vsel %vm349, %v205, 0
      %v366 = vsel %vm349, %v206, 0
      %v369 = vsel %vm349, %v207, 0
      %v372 = vsel %vm349, %v208, 0
      %v375 = vsel %vm349, %v209, 0
      %v378 = vsel %vm349, %v210, 0
      %v381 = vsel %vm349, %v211, 0
      %v384 = vsel %vm349, %v212, 0
      %v387 = vsel %vm349, %v213, 0
      %v390 = vsel %vm349, %v214, 0
      %v393 = vsel %vm349, %v215, 0
      %v396 = vsel %vm349, %v216, 0
      %398 = vmatprep.subr.mxu0 0.0
      %399 = vmatpush1.msra.mxu0 0.0
      %400 = vmatprep.subr.mxu0 0.0
      %401 = vmatpush1.msra.mxu0 0.0
      %402 = vmatprep.subr.mxu0 0.0
      %403 = vmatpush1.msra.mxu0 0.0
      %404 = vmatprep.subr.mxu0 0.0
      %405 = vmatpush1.msra.mxu0 0.0
      %406 = vmatprep.subr.mxu0 0.0
      %407 = vmatpush1.msra.mxu0 0.0
      %408 = vmatprep.subr.mxu0 0.0
      %409 = vmatpush1.msra.mxu0 0.0
      %410 = vmatprep.subr.mxu0 0.0
      %411 = vmatpush1.msra.mxu0 0.0
      %412 = vmatprep.subr.mxu0 0.0
      %413 = vmatpush1.msra.mxu0 0.0
      %414 = vmatprep.subr.mxu0 0.0
      %415 = vmatpush1.msra.mxu0 0.0
      %416 = vmatprep.subr.mxu0 0.0
      %417 = vmatpush1.msra.mxu0 0.0
      %418 = vmatprep.subr.mxu0 0.0
      %419 = vmatpush1.msra.mxu0 0.0
      %420 = vmatprep.subr.mxu0 0.0
      %421 = vmatpush1.msra.mxu0 0.0
      %422 = vmatprep.subr.mxu0 0.0
      %423 = vmatpush1.msra.mxu0 0.0
      %424 = vmatprep.subr.mxu0 0.0
      %425 = vmatpush1.msra.mxu0 0.0
      %426 = vmatprep.subr.mxu0 0.0
      %427 = vmatpush1.msra.mxu0 0.0
      %428 = vmatprep.subr.mxu0 0.0
      %429 = vmatpush1.msra.mxu0 %v348
      %430 = vmatprep.subr.mxu0 0.0
      %431 = vmatpush2.msra.mxu0 0.0
      %432 = vmatprep.subr.mxu0 0.0
      %433 = vmatpush2.msra.mxu0 0.0
      %434 = vmatprep.subr.mxu0 0.0
      %435 = vmatpush2.msra.mxu0 0.0
      %436 = vmatprep.subr.mxu0 0.0
      %437 = vmatpush2.msra.mxu0 0.0
      %438 = vmatprep.subr.mxu0 0.0
      %439 = vmatpush2.msra.mxu0 0.0
      %440 = vmatprep.subr.mxu0 0.0
      %441 = vmatpush2.msra.mxu0 0.0
      %442 = vmatprep.subr.mxu0 0.0
      %443 = vmatpush2.msra.mxu0 0.0
      %444 = vmatprep.subr.mxu0 0.0
      %445 = vmatpush2.msra.mxu0 0.0
      %446 = vmatprep.subr.mxu0 0.0
      %447 = vmatpush2.msra.mxu0 0.0
      %448 = vmatprep.subr.mxu0 0.0
      %449 = vmatpush2.msra.mxu0 0.0
      %450 = vmatprep.subr.mxu0 0.0
      %451 = vmatpush2.msra.mxu0 0.0
      %452 = vmatprep.subr.mxu0 0.0
      %453 = vmatpush2.msra.mxu0 0.0
      %454 = vmatprep.subr.mxu0 0.0
      %455 = vmatpush2.msra.mxu0 0.0
      %456 = vmatprep.subr.mxu0 0.0
      %457 = vmatpush2.msra.mxu0 0.0
      %458 = vmatprep.subr.mxu0 0.0
      %459 = vmatpush2.msra.mxu0 0.0
      %460 = vmatprep.subr.mxu0 0.0
      %461 = vmatpush2.msra.mxu0 0.0
      %462 = vmatprep.mubr.f32.mxu0 0.0
      %463 = vmatmul.mubr.f32.gmra.mxu0 %v351
      %v464 = vpop.f32.mrf.mxu0
      %v465 = vadd.f32 0.0, %v464
      %v466 = vpop.f32.mrf.mxu0
      %467 = vmatprep.mubr.f32.mxu0 0.0
      %468 = vmatmul.mubr.f32.gmra.mxu0 %v354
      %v469 = vpop.f32.mrf.mxu0
      %v470 = vadd.f32 0.0, %v469
      %v471 = vpop.f32.mrf.mxu0
      %472 = vmatprep.mubr.f32.mxu0 0.0
      %473 = vmatmul.mubr.f32.gmra.mxu0 %v357
      %v474 = vpop.f32.mrf.mxu0
      %v475 = vadd.f32 0.0, %v474
      %v476 = vpop.f32.mrf.mxu0
      %477 = vmatprep.mubr.f32.mxu0 0.0
      %478 = vmatmul.mubr.f32.gmra.mxu0 %v360
      %v479 = vpop.f32.mrf.mxu0
      %v480 = vadd.f32 0.0, %v479
      %v481 = vpop.f32.mrf.mxu0
      %482 = vmatprep.mubr.f32.mxu0 0.0
      %483 = vmatmul.mubr.f32.gmra.mxu0 %v363
      %v484 = vpop.f32.mrf.mxu0
      %v485 = vadd.f32 0.0, %v484
      %v486 = vpop.f32.mrf.mxu0
      %487 = vmatprep.mubr.f32.mxu0 0.0
      %488 = vmatmul.mubr.f32.gmra.mxu0 %v366
      %v489 = vpop.f32.mrf.mxu0
      %v490 = vadd.f32 0.0, %v489
      %v491 = vpop.f32.mrf.mxu0
      %492 = vmatprep.mubr.f32.mxu0 0.0
      %493 = vmatmul.mubr.f32.gmra.mxu0 %v369
      %v494 = vpop.f32.mrf.mxu0
      %v495 = vadd.f32 0.0, %v494
      %v496 = vpop.f32.mrf.mxu0
      %497 = vmatprep.mubr.f32.mxu0 0.0
      %498 = vmatmul.mubr.f32.gmra.mxu0 %v372
      %v499 = vpop.f32.mrf.mxu0
      %v500 = vadd.f32 0.0, %v499
      %v501 = vpop.f32.mrf.mxu0
      %502 = vmatprep.mubr.f32.mxu0 0.0
      %503 = vmatmul.mubr.f32.gmra.mxu0 %v375
      %v504 = vpop.f32.mrf.mxu0
      %v505 = vadd.f32 0.0, %v504
      %v506 = vpop.f32.mrf.mxu0
      %507 = vmatprep.mubr.f32.mxu0 0.0
      %508 = vmatmul.mubr.f32.gmra.mxu0 %v378
      %v509 = vpop.f32.mrf.mxu0
      %v510 = vadd.f32 0.0, %v509
      %v511 = vpop.f32.mrf.mxu0
      %512 = vmatprep.mubr.f32.mxu0 0.0
      %513 = vmatmul.mubr.f32.gmra.mxu0 %v381
      %v514 = vpop.f32.mrf.mxu0
      %v515 = vadd.f32 0.0, %v514
      %v516 = vpop.f32.mrf.mxu0
      %517 = vmatprep.mubr.f32.mxu0 0.0
      %518 = vmatmul.mubr.f32.gmra.mxu0 %v384
      %v519 = vpop.f32.mrf.mxu0
      %v520 = vadd.f32 0.0, %v519
      %v521 = vpop.f32.mrf.mxu0
      %522 = vmatprep.mubr.f32.mxu0 0.0
      %523 = vmatmul.mubr.f32.gmra.mxu0 %v387
      %v524 = vpop.f32.mrf.mxu0
      %v525 = vadd.f32 0.0, %v524
      %v526 = vpop.f32.mrf.mxu0
      %527 = vmatprep.mubr.f32.mxu0 0.0
      %528 = vmatmul.mubr.f32.gmra.mxu0 %v390
      %v529 = vpop.f32.mrf.mxu0
      %v530 = vadd.f32 0.0, %v529
      %v531 = vpop.f32.mrf.mxu0
      %532 = vmatprep.mubr.f32.mxu0 0.0
      %533 = vmatmul.mubr.f32.gmra.mxu0 %v393
      %v534 = vpop.f32.mrf.mxu0
      %v535 = vadd.f32 0.0, %v534
      %v536 = vpop.f32.mrf.mxu0
      %537 = vmatprep.mubr.f32.mxu0 0.0
      %538 = vmatmul.mubr.f32.gmra.mxu0 %v396
      %v539 = vpop.f32.mrf.mxu0
      %v540 = vadd.f32 0.0, %v539
      %v541 = vpop.f32.mrf.mxu0
      %542 = vdwg.mxu0
      %vm543 = vcmask 162816
      %v545 = vsel %vm543, %v329, 0
      %v548 = vsel %vm543, %v330, 0
      %v551 = vsel %vm543, %v331, 0
      %v554 = vsel %vm543, %v332, 0
      %v557 = vsel %vm543, %v333, 0
      %v560 = vsel %vm543, %v334, 0
      %v563 = vsel %vm543, %v335, 0
      %v566 = vsel %vm543, %v336, 0
      %v569 = vsel %vm543, %v337, 0
      %v572 = vsel %vm543, %v338, 0
      %v575 = vsel %vm543, %v339, 0
      %v578 = vsel %vm543, %v340, 0
      %v581 = vsel %vm543, %v341, 0
      %v584 = vsel %vm543, %v342, 0
      %v587 = vsel %vm543, %v343, 0
      %v590 = vsel %vm543, %v344, 0
      %vm592 = vcmask 1043456
      %v594 = vsel %vm592, %v347, 0
      %596 = vmatprep.subr.mxu0 0.0
      %597 = vmatpush1.msra.mxu0 0.0
      %598 = vmatprep.subr.mxu0 0.0
      %599 = vmatpush1.msra.mxu0 0.0
      %600 = vmatprep.subr.mxu0 0.0
      %601 = vmatpush1.msra.mxu0 0.0
      %602 = vmatprep.subr.mxu0 0.0
      %603 = vmatpush1.msra.mxu0 0.0
      %604 = vmatprep.subr.mxu0 0.0
      %605 = vmatpush1.msra.mxu0 0.0
      %606 = vmatprep.subr.mxu0 0.0
      %607 = vmatpush1.msra.mxu0 0.0
      %608 = vmatprep.subr.mxu0 0.0
      %609 = vmatpush1.msra.mxu0 0.0
      %610 = vmatprep.subr.mxu0 0.0
      %611 = vmatpush1.msra.mxu0 0.0
      %612 = vmatprep.subr.mxu0 0.0
      %613 = vmatpush1.msra.mxu0 0.0
      %614 = vmatprep.subr.mxu0 0.0
      %615 = vmatpush1.msra.mxu0 0.0
      %616 = vmatprep.subr.mxu0 0.0
      %617 = vmatpush1.msra.mxu0 0.0
      %618 = vmatprep.subr.mxu0 0.0
      %619 = vmatpush1.msra.mxu0 0.0
      %620 = vmatprep.subr.mxu0 0.0
      %621 = vmatpush1.msra.mxu0 0.0
      %622 = vmatprep.subr.mxu0 0.0
      %623 = vmatpush1.msra.mxu0 %v594
      %624 = vmatprep.subr.mxu0 0.0
      %625 = vmatpush1.msra.mxu0 %v346
      %626 = vmatprep.subr.mxu0 0.0
      %627 = vmatpush1.msra.mxu0 %v345
      %628 = vmatprep.subr.mxu0 0.0
      %629 = vmatpush2.msra.mxu0 0.0
      %630 = vmatprep.subr.mxu0 0.0
      %631 = vmatpush2.msra.mxu0 0.0
      %632 = vmatprep.subr.mxu0 0.0
      %633 = vmatpush2.msra.mxu0 0.0
      %634 = vmatprep.subr.mxu0 0.0
      %635 = vmatpush2.msra.mxu0 0.0
      %636 = vmatprep.subr.mxu0 0.0
      %637 = vmatpush2.msra.mxu0 0.0
      %638 = vmatprep.subr.mxu0 0.0
      %639 = vmatpush2.msra.mxu0 0.0
      %640 = vmatprep.subr.mxu0 0.0
      %641 = vmatpush2.msra.mxu0 0.0
      %642 = vmatprep.subr.mxu0 0.0
      %643 = vmatpush2.msra.mxu0 0.0
      %644 = vmatprep.subr.mxu0 0.0
      %645 = vmatpush2.msra.mxu0 0.0
      %646 = vmatprep.subr.mxu0 0.0
      %647 = vmatpush2.msra.mxu0 0.0
      %648 = vmatprep.subr.mxu0 0.0
      %649 = vmatpush2.msra.mxu0 0.0
      %650 = vmatprep.subr.mxu0 0.0
      %651 = vmatpush2.msra.mxu0 0.0
      %652 = vmatprep.subr.mxu0 0.0
      %653 = vmatpush2.msra.mxu0 0.0
      %654 = vmatprep.subr.mxu0 0.0
      %655 = vmatpush2.msra.mxu0 0.0
      %656 = vmatprep.subr.mxu0 0.0
      %657 = vmatpush2.msra.mxu0 0.0
      %658 = vmatprep.subr.mxu0 0.0
      %659 = vmatpush2.msra.mxu0 0.0
      %660 = vmatprep.mubr.f32.mxu0 0.0
      %661 = vmatmul.mubr.f32.gmra.mxu0 %v545
      %v662 = vpop.f32.mrf.mxu0
      %v663 = vadd.f32 %v465, %v662
      %v664 = vpop.f32.mrf.mxu0
      %665 = vmatprep.mubr.f32.mxu0 0.0
      %666 = vmatmul.mubr.f32.gmra.mxu0 %v548
      %v667 = vpop.f32.mrf.mxu0
      %v668 = vadd.f32 %v470, %v667
      %v669 = vpop.f32.mrf.mxu0
      %670 = vmatprep.mubr.f32.mxu0 0.0
      %671 = vmatmul.mubr.f32.gmra.mxu0 %v551
      %v672 = vpop.f32.mrf.mxu0
      %v673 = vadd.f32 %v475, %v672
      %v674 = vpop.f32.mrf.mxu0
      %675 = vmatprep.mubr.f32.mxu0 0.0
      %676 = vmatmul.mubr.f32.gmra.mxu0 %v554
      %v677 = vpop.f32.mrf.mxu0
      %v678 = vadd.f32 %v480, %v677
      %v679 = vpop.f32.mrf.mxu0
      %680 = vmatprep.mubr.f32.mxu0 0.0
      %681 = vmatmul.mubr.f32.gmra.mxu0 %v557
      %v682 = vpop.f32.mrf.mxu0
      %v683 = vadd.f32 %v485, %v682
      %v684 = vpop.f32.mrf.mxu0
      %685 = vmatprep.mubr.f32.mxu0 0.0
      %686 = vmatmul.mubr.f32.gmra.mxu0 %v560
      %v687 = vpop.f32.mrf.mxu0
      %v688 = vadd.f32 %v490, %v687
      %v689 = vpop.f32.mrf.mxu0
      %690 = vmatprep.mubr.f32.mxu0 0.0
      %691 = vmatmul.mubr.f32.gmra.mxu0 %v563
      %v692 = vpop.f32.mrf.mxu0
      %v693 = vadd.f32 %v495, %v692
      %v694 = vpop.f32.mrf.mxu0
      %695 = vmatprep.mubr.f32.mxu0 0.0
      %696 = vmatmul.mubr.f32.gmra.mxu0 %v566
      %v697 = vpop.f32.mrf.mxu0
      %v698 = vadd.f32 %v500, %v697
      %v699 = vpop.f32.mrf.mxu0
      %700 = vmatprep.mubr.f32.mxu0 0.0
      %701 = vmatmul.mubr.f32.gmra.mxu0 %v569
      %v702 = vpop.f32.mrf.mxu0
      %v703 = vadd.f32 %v505, %v702
      %v704 = vpop.f32.mrf.mxu0
      %705 = vmatprep.mubr.f32.mxu0 0.0
      %706 = vmatmul.mubr.f32.gmra.mxu0 %v572
      %v707 = vpop.f32.mrf.mxu0
      %v708 = vadd.f32 %v510, %v707
      %v709 = vpop.f32.mrf.mxu0
      %710 = vmatprep.mubr.f32.mxu0 0.0
      %711 = vmatmul.mubr.f32.gmra.mxu0 %v575
      %v712 = vpop.f32.mrf.mxu0
      %v713 = vadd.f32 %v515, %v712
      %v714 = vpop.f32.mrf.mxu0
      %715 = vmatprep.mubr.f32.mxu0 0.0
      %716 = vmatmul.mubr.f32.gmra.mxu0 %v578
      %v717 = vpop.f32.mrf.mxu0
      %v718 = vadd.f32 %v520, %v717
      %v719 = vpop.f32.mrf.mxu0
      %720 = vmatprep.mubr.f32.mxu0 0.0
      %721 = vmatmul.mubr.f32.gmra.mxu0 %v581
      %v722 = vpop.f32.mrf.mxu0
      %v723 = vadd.f32 %v525, %v722
      %v724 = vpop.f32.mrf.mxu0
      %725 = vmatprep.mubr.f32.mxu0 0.0
      %726 = vmatmul.mubr.f32.gmra.mxu0 %v584
      %v727 = vpop.f32.mrf.mxu0
      %v728 = vadd.f32 %v530, %v727
      %v729 = vpop.f32.mrf.mxu0
      %730 = vmatprep.mubr.f32.mxu0 0.0
      %731 = vmatmul.mubr.f32.gmra.mxu0 %v587
      %v732 = vpop.f32.mrf.mxu0
      %v733 = vadd.f32 %v535, %v732
      %v734 = vpop.f32.mrf.mxu0
      %735 = vmatprep.mubr.f32.mxu0 0.0
      %736 = vmatmul.mubr.f32.gmra.mxu0 %v590
      %v737 = vpop.f32.mrf.mxu0
      %v738 = vadd.f32 %v540, %v737
      %v739 = vpop.f32.mrf.mxu0
      %740 = vdwg.mxu0
      %v741 = vmul.f32 %v663, 0.70710677
      %v742 = vmul.f32 %v668, 0.70710677
      %v743 = vmul.f32 %v673, 0.70710677
      %v744 = vmul.f32 %v678, 0.70710677
      %v745 = vmul.f32 %v683, 0.70710677
      %v746 = vmul.f32 %v688, 0.70710677
      %v747 = vmul.f32 %v693, 0.70710677
      %v748 = vmul.f32 %v698, 0.70710677
      %v749 = vmul.f32 %v703, 0.70710677
      %v750 = vmul.f32 %v708, 0.70710677
      %v751 = vmul.f32 %v713, 0.70710677
      %v752 = vmul.f32 %v718, 0.70710677
      %v753 = vmul.f32 %v723, 0.70710677
      %v754 = vmul.f32 %v728, 0.70710677
      %v755 = vmul.f32 %v733, 0.70710677
      %v756 = vmul.f32 %v738, 0.70710677
      %v757 = vand.u32 2147483647, %v741
      %v758 = vand.u32 2147483647, %v742
      %v759 = vand.u32 2147483647, %v743
      %v760 = vand.u32 2147483647, %v744
      %v761 = vand.u32 2147483647, %v745
      %v762 = vand.u32 2147483647, %v746
      %v763 = vand.u32 2147483647, %v747
      %v764 = vand.u32 2147483647, %v748
      %v765 = vand.u32 2147483647, %v749
      %v766 = vand.u32 2147483647, %v750
      %v767 = vand.u32 2147483647, %v751
      %v768 = vand.u32 2147483647, %v752
      %v769 = vand.u32 2147483647, %v753
      %v770 = vand.u32 2147483647, %v754
      %v771 = vand.u32 2147483647, %v755
      %v772 = vand.u32 2147483647, %v756
      %v773 = vmul.f32 %v757, 0.3275911
      %v774 = vmul.f32 %v758, 0.3275911
      %v775 = vmul.f32 %v759, 0.3275911
      %v776 = vmul.f32 %v760, 0.3275911
      %v777 = vmul.f32 %v761, 0.3275911
      %v778 = vmul.f32 %v762, 0.3275911
      %v779 = vmul.f32 %v763, 0.3275911
      %v780 = vmul.f32 %v764, 0.3275911
      %v781 = vmul.f32 %v765, 0.3275911
      %v782 = vmul.f32 %v766, 0.3275911
      %v783 = vmul.f32 %v767, 0.3275911
      %v784 = vmul.f32 %v768, 0.3275911
      %v785 = vmul.f32 %v769, 0.3275911
      %v786 = vmul.f32 %v770, 0.3275911
      %v787 = vmul.f32 %v771, 0.3275911
      %v788 = vmul.f32 %v772, 0.3275911
      %v789 = vadd.f32 %v773, 1.0
      %v790 = vadd.f32 %v774, 1.0
      %v791 = vadd.f32 %v775, 1.0
      %v792 = vadd.f32 %v776, 1.0
      %v793 = vadd.f32 %v777, 1.0
      %v794 = vadd.f32 %v778, 1.0
      %v795 = vadd.f32 %v779, 1.0
      %v796 = vadd.f32 %v780, 1.0
      %v797 = vadd.f32 %v781, 1.0
      %v798 = vadd.f32 %v782, 1.0
      %v799 = vadd.f32 %v783, 1.0
      %v800 = vadd.f32 %v784, 1.0
      %v801 = vadd.f32 %v785, 1.0
      %v802 = vadd.f32 %v786, 1.0
      %v803 = vadd.f32 %v787, 1.0
      %v804 = vadd.f32 %v788, 1.0
      %v805 = vrcp.pop %v789
      %v806 = vrcp.pop %v790
      %v807 = vrcp.pop %v791
      %v808 = vrcp.pop %v792
      %v809 = vrcp.pop %v793
      %v810 = vrcp.pop %v794
      %v811 = vrcp.pop %v795
      %v812 = vrcp.pop %v796
      %v813 = vrcp.pop %v797
      %v814 = vrcp.pop %v798
      %v815 = vrcp.pop %v799
      %v816 = vrcp.pop %v800
      %v817 = vrcp.pop %v801
      %v818 = vrcp.pop %v802
      %v819 = vrcp.pop %v803
      %v820 = vrcp.pop %v804
      %v821 = vmul.f32 %v789, %v805
      %v822 = vmul.f32 %v790, %v806
      %v823 = vmul.f32 %v791, %v807
      %v824 = vmul.f32 %v792, %v808
      %v825 = vmul.f32 %v793, %v809
      %v826 = vmul.f32 %v794, %v810
      %v827 = vmul.f32 %v795, %v811
      %v828 = vmul.f32 %v796, %v812
      %v829 = vmul.f32 %v797, %v813
      %v830 = vmul.f32 %v798, %v814
      %v831 = vmul.f32 %v799, %v815
      %v832 = vmul.f32 %v800, %v816
      %v833 = vmul.f32 %v801, %v817
      %v834 = vmul.f32 %v802, %v818
      %v835 = vmul.f32 %v803, %v819
      %v836 = vmul.f32 %v804, %v820
      %v837 = vsub.f32 2.0, %v821
      %v838 = vsub.f32 2.0, %v822
      %v839 = vsub.f32 2.0, %v823
      %v840 = vsub.f32 2.0, %v824
      %v841 = vsub.f32 2.0, %v825
      %v842 = vsub.f32 2.0, %v826
      %v843 = vsub.f32 2.0, %v827
      %v844 = vsub.f32 2.0, %v828
      %v845 = vsub.f32 2.0, %v829
      %v846 = vsub.f32 2.0, %v830
      %v847 = vsub.f32 2.0, %v831
      %v848 = vsub.f32 2.0, %v832
      %v849 = vsub.f32 2.0, %v833
      %v850 = vsub.f32 2.0, %v834
      %v851 = vsub.f32 2.0, %v835
      %v852 = vsub.f32 2.0, %v836
      %v853 = vmul.f32 %v805, %v837
      %v854 = vmul.f32 %v806, %v838
      %v855 = vmul.f32 %v807, %v839
      %v856 = vmul.f32 %v808, %v840
      %v857 = vmul.f32 %v809, %v841
      %v858 = vmul.f32 %v810, %v842
      %v859 = vmul.f32 %v811, %v843
      %v860 = vmul.f32 %v812, %v844
      %v861 = vmul.f32 %v813, %v845
      %v862 = vmul.f32 %v814, %v846
      %v863 = vmul.f32 %v815, %v847
      %v864 = vmul.f32 %v816, %v848
      %v865 = vmul.f32 %v817, %v849
      %v866 = vmul.f32 %v818, %v850
      %v867 = vmul.f32 %v819, %v851
      %v868 = vmul.f32 %v820, %v852
      %v869 = vmul.f32 %v853, 1.0614054
      %v870 = vmul.f32 %v854, 1.0614054
      %v871 = vmul.f32 %v855, 1.0614054
      %v872 = vmul.f32 %v856, 1.0614054
      %v873 = vmul.f32 %v857, 1.0614054
      %v874 = vmul.f32 %v858, 1.0614054
      %v875 = vmul.f32 %v859, 1.0614054
      %v876 = vmul.f32 %v860, 1.0614054
      %v877 = vmul.f32 %v861, 1.0614054
      %v878 = vmul.f32 %v862, 1.0614054
      %v879 = vmul.f32 %v863, 1.0614054
      %v880 = vmul.f32 %v864, 1.0614054
      %v881 = vmul.f32 %v865, 1.0614054
      %v882 = vmul.f32 %v866, 1.0614054
      %v883 = vmul.f32 %v867, 1.0614054
      %v884 = vmul.f32 %v868, 1.0614054
      %v885 = vadd.f32 %v869, -1.4531521
      %v886 = vadd.f32 %v870, -1.4531521
      %v887 = vadd.f32 %v871, -1.4531521
      %v888 = vadd.f32 %v872, -1.4531521
      %v889 = vadd.f32 %v873, -1.4531521
      %v890 = vadd.f32 %v874, -1.4531521
      %v891 = vadd.f32 %v875, -1.4531521
      %v892 = vadd.f32 %v876, -1.4531521
      %v893 = vadd.f32 %v877, -1.4531521
      %v894 = vadd.f32 %v878, -1.4531521
      %v895 = vadd.f32 %v879, -1.4531521
      %v896 = vadd.f32 %v880, -1.4531521
      %v897 = vadd.f32 %v881, -1.4531521
      %v898 = vadd.f32 %v882, -1.4531521
      %v899 = vadd.f32 %v883, -1.4531521
      %v900 = vadd.f32 %v884, -1.4531521
      %v901 = vmul.f32 %v853, %v885
      %v902 = vmul.f32 %v854, %v886
      %v903 = vmul.f32 %v855, %v887
      %v904 = vmul.f32 %v856, %v888
      %v905 = vmul.f32 %v857, %v889
      %v906 = vmul.f32 %v858, %v890
      %v907 = vmul.f32 %v859, %v891
      %v908 = vmul.f32 %v860, %v892
      %v909 = vmul.f32 %v861, %v893
      %v910 = vmul.f32 %v862, %v894
      %v911 = vmul.f32 %v863, %v895
      %v912 = vmul.f32 %v864, %v896
      %v913 = vmul.f32 %v865, %v897
      %v914 = vmul.f32 %v866, %v898
      %v915 = vmul.f32 %v867, %v899
      %v916 = vmul.f32 %v868, %v900
      %v917 = vadd.f32 %v901, 1.4214138
      %v918 = vadd.f32 %v902, 1.4214138
      %v919 = vadd.f32 %v903, 1.4214138
      %v920 = vadd.f32 %v904, 1.4214138
      %v921 = vadd.f32 %v905, 1.4214138
      %v922 = vadd.f32 %v906, 1.4214138
      %v923 = vadd.f32 %v907, 1.4214138
      %v924 = vadd.f32 %v908, 1.4214138
      %v925 = vadd.f32 %v909, 1.4214138
      %v926 = vadd.f32 %v910, 1.4214138
      %v927 = vadd.f32 %v911, 1.4214138
      %v928 = vadd.f32 %v912, 1.4214138
      %v929 = vadd.f32 %v913, 1.4214138
      %v930 = vadd.f32 %v914, 1.4214138
      %v931 = vadd.f32 %v915, 1.4214138
      %v932 = vadd.f32 %v916, 1.4214138
      %v933 = vmul.f32 %v853, %v917
      %v934 = vmul.f32 %v854, %v918
      %v935 = vmul.f32 %v855, %v919
      %v936 = vmul.f32 %v856, %v920
      %v937 = vmul.f32 %v857, %v921
      %v938 = vmul.f32 %v858, %v922
      %v939 = vmul.f32 %v859, %v923
      %v940 = vmul.f32 %v860, %v924
      %v941 = vmul.f32 %v861, %v925
      %v942 = vmul.f32 %v862, %v926
      %v943 = vmul.f32 %v863, %v927
      %v944 = vmul.f32 %v864, %v928
      %v945 = vmul.f32 %v865, %v929
      %v946 = vmul.f32 %v866, %v930
      %v947 = vmul.f32 %v867, %v931
      %v948 = vmul.f32 %v868, %v932
      %v949 = vadd.f32 %v933, -0.28449672
      %v950 = vadd.f32 %v934, -0.28449672
      %v951 = vadd.f32 %v935, -0.28449672
      %v952 = vadd.f32 %v936, -0.28449672
      %v953 = vadd.f32 %v937, -0.28449672
      %v954 = vadd.f32 %v938, -0.28449672
      %v955 = vadd.f32 %v939, -0.28449672
      %v956 = vadd.f32 %v940, -0.28449672
      %v957 = vadd.f32 %v941, -0.28449672
      %v958 = vadd.f32 %v942, -0.28449672
      %v959 = vadd.f32 %v943, -0.28449672
      %v960 = vadd.f32 %v944, -0.28449672
      %v961 = vadd.f32 %v945, -0.28449672
      %v962 = vadd.f32 %v946, -0.28449672
      %v963 = vadd.f32 %v947, -0.28449672
      %v964 = vadd.f32 %v948, -0.28449672
      %v965 = vmul.f32 %v853, %v949
      %v966 = vmul.f32 %v854, %v950
      %v967 = vmul.f32 %v855, %v951
      %v968 = vmul.f32 %v856, %v952
      %v969 = vmul.f32 %v857, %v953
      %v970 = vmul.f32 %v858, %v954
      %v971 = vmul.f32 %v859, %v955
      %v972 = vmul.f32 %v860, %v956
      %v973 = vmul.f32 %v861, %v957
      %v974 = vmul.f32 %v862, %v958
      %v975 = vmul.f32 %v863, %v959
      %v976 = vmul.f32 %v864, %v960
      %v977 = vmul.f32 %v865, %v961
      %v978 = vmul.f32 %v866, %v962
      %v979 = vmul.f32 %v867, %v963
      %v980 = vmul.f32 %v868, %v964
      %v981 = vadd.f32 %v965, 0.2548296
      %v982 = vadd.f32 %v966, 0.2548296
      %v983 = vadd.f32 %v967, 0.2548296
      %v984 = vadd.f32 %v968, 0.2548296
      %v985 = vadd.f32 %v969, 0.2548296
      %v986 = vadd.f32 %v970, 0.2548296
      %v987 = vadd.f32 %v971, 0.2548296
      %v988 = vadd.f32 %v972, 0.2548296
      %v989 = vadd.f32 %v973, 0.2548296
      %v990 = vadd.f32 %v974, 0.2548296
      %v991 = vadd.f32 %v975, 0.2548296
      %v992 = vadd.f32 %v976, 0.2548296
      %v993 = vadd.f32 %v977, 0.2548296
      %v994 = vadd.f32 %v978, 0.2548296
      %v995 = vadd.f32 %v979, 0.2548296
      %v996 = vadd.f32 %v980, 0.2548296
      %v997 = vmul.f32 %v853, %v981
      %v998 = vmul.f32 %v854, %v982
      %v999 = vmul.f32 %v855, %v983
      %v1000 = vmul.f32 %v856, %v984
      %v1001 = vmul.f32 %v857, %v985
      %v1002 = vmul.f32 %v858, %v986
      %v1003 = vmul.f32 %v859, %v987
      %v1004 = vmul.f32 %v860, %v988
      %v1005 = vmul.f32 %v861, %v989
      %v1006 = vmul.f32 %v862, %v990
      %v1007 = vmul.f32 %v863, %v991
      %v1008 = vmul.f32 %v864, %v992
      %v1009 = vmul.f32 %v865, %v993
      %v1010 = vmul.f32 %v866, %v994
      %v1011 = vmul.f32 %v867, %v995
      %v1012 = vmul.f32 %v868, %v996
      %v1013 = vmul.f32 %v757, %v757
      %v1014 = vmul.f32 %v758, %v758
      %v1015 = vmul.f32 %v759, %v759
      %v1016 = vmul.f32 %v760, %v760
      %v1017 = vmul.f32 %v761, %v761
      %v1018 = vmul.f32 %v762, %v762
      %v1019 = vmul.f32 %v763, %v763
      %v1020 = vmul.f32 %v764, %v764
      %v1021 = vmul.f32 %v765, %v765
      %v1022 = vmul.f32 %v766, %v766
      %v1023 = vmul.f32 %v767, %v767
      %v1024 = vmul.f32 %v768, %v768
      %v1025 = vmul.f32 %v769, %v769
      %v1026 = vmul.f32 %v770, %v770
      %v1027 = vmul.f32 %v771, %v771
      %v1028 = vmul.f32 %v772, %v772
      %v1029 = vsub.f32 0.0, %v1013
      %v1030 = vsub.f32 0.0, %v1014
      %v1031 = vsub.f32 0.0, %v1015
      %v1032 = vsub.f32 0.0, %v1016
      %v1033 = vsub.f32 0.0, %v1017
      %v1034 = vsub.f32 0.0, %v1018
      %v1035 = vsub.f32 0.0, %v1019
      %v1036 = vsub.f32 0.0, %v1020
      %v1037 = vsub.f32 0.0, %v1021
      %v1038 = vsub.f32 0.0, %v1022
      %v1039 = vsub.f32 0.0, %v1023
      %v1040 = vsub.f32 0.0, %v1024
      %v1041 = vsub.f32 0.0, %v1025
      %v1042 = vsub.f32 0.0, %v1026
      %v1043 = vsub.f32 0.0, %v1027
      %v1044 = vsub.f32 0.0, %v1028
      %v1045 = vmul.f32 %v1029, 1.442695
      %v1046 = vpow.pop %v1045
      %v1047 = vmul.f32 %v1030, 1.442695
      %v1048 = vpow.pop %v1047
      %v1049 = vmul.f32 %v1031, 1.442695
      %v1050 = vpow.pop %v1049
      %v1051 = vmul.f32 %v1032, 1.442695
      %v1052 = vpow.pop %v1051
      %v1053 = vmul.f32 %v1033, 1.442695
      %v1054 = vpow.pop %v1053
      %v1055 = vmul.f32 %v1034, 1.442695
      %v1056 = vpow.pop %v1055
      %v1057 = vmul.f32 %v1035, 1.442695
      %v1058 = vpow.pop %v1057
      %v1059 = vmul.f32 %v1036, 1.442695
      %v1060 = vpow.pop %v1059
      %v1061 = vmul.f32 %v1037, 1.442695
      %v1062 = vpow.pop %v1061
      %v1063 = vmul.f32 %v1038, 1.442695
      %v1064 = vpow.pop %v1063
      %v1065 = vmul.f32 %v1039, 1.442695
      %v1066 = vpow.pop %v1065
      %v1067 = vmul.f32 %v1040, 1.442695
      %v1068 = vpow.pop %v1067
      %v1069 = vmul.f32 %v1041, 1.442695
      %v1070 = vpow.pop %v1069
      %v1071 = vmul.f32 %v1042, 1.442695
      %v1072 = vpow.pop %v1071
      %v1073 = vmul.f32 %v1043, 1.442695
      %v1074 = vpow.pop %v1073
      %v1075 = vmul.f32 %v1044, 1.442695
      %v1076 = vpow.pop %v1075
      %v1077 = vmul.f32 %v997, %v1046
      %v1078 = vmul.f32 %v998, %v1048
      %v1079 = vmul.f32 %v999, %v1050
      %v1080 = vmul.f32 %v1000, %v1052
      %v1081 = vmul.f32 %v1001, %v1054
      %v1082 = vmul.f32 %v1002, %v1056
      %v1083 = vmul.f32 %v1003, %v1058
      %v1084 = vmul.f32 %v1004, %v1060
      %v1085 = vmul.f32 %v1005, %v1062
      %v1086 = vmul.f32 %v1006, %v1064
      %v1087 = vmul.f32 %v1007, %v1066
      %v1088 = vmul.f32 %v1008, %v1068
      %v1089 = vmul.f32 %v1009, %v1070
      %v1090 = vmul.f32 %v1010, %v1072
      %v1091 = vmul.f32 %v1011, %v1074
      %v1092 = vmul.f32 %v1012, %v1076
      %v1093 = vsub.f32 1.0, %v1077
      %v1094 = vsub.f32 1.0, %v1078
      %v1095 = vsub.f32 1.0, %v1079
      %v1096 = vsub.f32 1.0, %v1080
      %v1097 = vsub.f32 1.0, %v1081
      %v1098 = vsub.f32 1.0, %v1082
      %v1099 = vsub.f32 1.0, %v1083
      %v1100 = vsub.f32 1.0, %v1084
      %v1101 = vsub.f32 1.0, %v1085
      %v1102 = vsub.f32 1.0, %v1086
      %v1103 = vsub.f32 1.0, %v1087
      %v1104 = vsub.f32 1.0, %v1088
      %v1105 = vsub.f32 1.0, %v1089
      %v1106 = vsub.f32 1.0, %v1090
      %v1107 = vsub.f32 1.0, %v1091
      %v1108 = vsub.f32 1.0, %v1092
      %vm1109 = vcmp.ge.f32.partialorder %v741, 0.0
      %vm1110 = vcmp.ge.f32.partialorder %v742, 0.0
      %vm1111 = vcmp.ge.f32.partialorder %v743, 0.0
      %vm1112 = vcmp.ge.f32.partialorder %v744, 0.0
      %vm1113 = vcmp.ge.f32.partialorder %v745, 0.0
      %vm1114 = vcmp.ge.f32.partialorder %v746, 0.0
      %vm1115 = vcmp.ge.f32.partialorder %v747, 0.0
      %vm1116 = vcmp.ge.f32.partialorder %v748, 0.0
      %vm1117 = vcmp.ge.f32.partialorder %v749, 0.0
      %vm1118 = vcmp.ge.f32.partialorder %v750, 0.0
      %vm1119 = vcmp.ge.f32.partialorder %v751, 0.0
      %vm1120 = vcmp.ge.f32.partialorder %v752, 0.0
      %vm1121 = vcmp.ge.f32.partialorder %v753, 0.0
      %vm1122 = vcmp.ge.f32.partialorder %v754, 0.0
      %vm1123 = vcmp.ge.f32.partialorder %v755, 0.0
      %vm1124 = vcmp.ge.f32.partialorder %v756, 0.0
      %v1125 = vsub.f32 0.0, %v1093
      %v1126 = vsub.f32 0.0, %v1094
      %v1127 = vsub.f32 0.0, %v1095
      %v1128 = vsub.f32 0.0, %v1096
      %v1129 = vsub.f32 0.0, %v1097
      %v1130 = vsub.f32 0.0, %v1098
      %v1131 = vsub.f32 0.0, %v1099
      %v1132 = vsub.f32 0.0, %v1100
      %v1133 = vsub.f32 0.0, %v1101
      %v1134 = vsub.f32 0.0, %v1102
      %v1135 = vsub.f32 0.0, %v1103
      %v1136 = vsub.f32 0.0, %v1104
      %v1137 = vsub.f32 0.0, %v1105
      %v1138 = vsub.f32 0.0, %v1106
      %v1139 = vsub.f32 0.0, %v1107
      %v1140 = vsub.f32 0.0, %v1108
      %v1141 = vsel %vm1109, %v1093, %v1125
      %v1142 = vsel %vm1110, %v1094, %v1126
      %v1143 = vsel %vm1111, %v1095, %v1127
      %v1144 = vsel %vm1112, %v1096, %v1128
      %v1145 = vsel %vm1113, %v1097, %v1129
      %v1146 = vsel %vm1114, %v1098, %v1130
      %v1147 = vsel %vm1115, %v1099, %v1131
      %v1148 = vsel %vm1116, %v1100, %v1132
      %v1149 = vsel %vm1117, %v1101, %v1133
      %v1150 = vsel %vm1118, %v1102, %v1134
      %v1151 = vsel %vm1119, %v1103, %v1135
      %v1152 = vsel %vm1120, %v1104, %v1136
      %v1153 = vsel %vm1121, %v1105, %v1137
      %v1154 = vsel %vm1122, %v1106, %v1138
      %v1155 = vsel %vm1123, %v1107, %v1139
      %v1156 = vsel %vm1124, %v1108, %v1140
      %v1157 = vmul.f32 %v663, 0.5
      %v1158 = vmul.f32 %v668, 0.5
      %v1159 = vmul.f32 %v673, 0.5
      %v1160 = vmul.f32 %v678, 0.5
      %v1161 = vmul.f32 %v683, 0.5
      %v1162 = vmul.f32 %v688, 0.5
      %v1163 = vmul.f32 %v693, 0.5
      %v1164 = vmul.f32 %v698, 0.5
      %v1165 = vmul.f32 %v703, 0.5
      %v1166 = vmul.f32 %v708, 0.5
      %v1167 = vmul.f32 %v713, 0.5
      %v1168 = vmul.f32 %v718, 0.5
      %v1169 = vmul.f32 %v723, 0.5
      %v1170 = vmul.f32 %v728, 0.5
      %v1171 = vmul.f32 %v733, 0.5
      %v1172 = vmul.f32 %v738, 0.5
      %v1173 = vadd.f32 %v1141, 1.0
      %v1174 = vadd.f32 %v1142, 1.0
      %v1175 = vadd.f32 %v1143, 1.0
      %v1176 = vadd.f32 %v1144, 1.0
      %v1177 = vadd.f32 %v1145, 1.0
      %v1178 = vadd.f32 %v1146, 1.0
      %v1179 = vadd.f32 %v1147, 1.0
      %v1180 = vadd.f32 %v1148, 1.0
      %v1181 = vadd.f32 %v1149, 1.0
      %v1182 = vadd.f32 %v1150, 1.0
      %v1183 = vadd.f32 %v1151, 1.0
      %v1184 = vadd.f32 %v1152, 1.0
      %v1185 = vadd.f32 %v1153, 1.0
      %v1186 = vadd.f32 %v1154, 1.0
      %v1187 = vadd.f32 %v1155, 1.0
      %v1188 = vadd.f32 %v1156, 1.0
      %v1189 = vmul.f32 %v1157, %v1173
      %v1190 = vmul.f32 %v1158, %v1174
      %v1191 = vmul.f32 %v1159, %v1175
      %v1192 = vmul.f32 %v1160, %v1176
      %v1193 = vmul.f32 %v1161, %v1177
      %v1194 = vmul.f32 %v1162, %v1178
      %v1195 = vmul.f32 %v1163, %v1179
      %v1196 = vmul.f32 %v1164, %v1180
      %v1197 = vmul.f32 %v1165, %v1181
      %v1198 = vmul.f32 %v1166, %v1182
      %v1199 = vmul.f32 %v1167, %v1183
      %v1200 = vmul.f32 %v1168, %v1184
      %v1201 = vmul.f32 %v1169, %v1185
      %v1202 = vmul.f32 %v1170, %v1186
      %v1203 = vmul.f32 %v1171, %v1187
      %v1204 = vmul.f32 %v1172, %v1188
      %1205 = vst [vmem:[%s199] sm:$0xff] %v1189
      %1206 = vst [vmem:[%s199 + $0x8] sm:$0xff] %v1190
      %1207 = vst [vmem:[%s199 + $0x10] sm:$0xff] %v1191
      %1208 = vst [vmem:[%s199 + $0x18] sm:$0xff] %v1192
      %1209 = vst [vmem:[%s199 + $0x20] sm:$0xff] %v1193
      %1210 = vst [vmem:[%s199 + $0x28] sm:$0xff] %v1194
      %1211 = vst [vmem:[%s199 + $0x30] sm:$0xff] %v1195
      %1212 = vst [vmem:[%s199 + $0x38] sm:$0xff] %v1196
      %1213 = vst [vmem:[%s199 + $0x40] sm:$0xff] %v1197
      %1214 = vst [vmem:[%s199 + $0x48] sm:$0xff] %v1198
      %1215 = vst [vmem:[%s199 + $0x50] sm:$0xff] %v1199
      %1216 = vst [vmem:[%s199 + $0x58] sm:$0xff] %v1200
      %1217 = vst [vmem:[%s199 + $0x60] sm:$0xff] %v1201
      %1218 = vst [vmem:[%s199 + $0x68] sm:$0xff] %v1202
      %1219 = vst [vmem:[%s199 + $0x70] sm:$0xff] %v1203
      %1220 = vst [vmem:[%s199 + $0x78] sm:$0xff] %v1204
      %s1221 = smul.u32 16, %s15
      %p1222 = scmp.lt.s32.totalorder %s1221, 127
      %s1223 = scalar_select %p1222, %s1221, 127
      %s1224 = smul.addr %s1223, 8
      %s1225 = scalar_lea.vmem %s4, %s1224
      // Predicated region
      $region37: #{embedding_block_forward.1} parent=35 // pred_check
        %p1226 = pneg %p122
      $region38: #{embedding_block_forward.1} parent=35 // pred_check_branch
        %1228 = sbr.rel (%p1226) target = $region40
      $region39: #{embedding_block_forward.1} parent=35 // pred_region
        %s1229 = smul.u32 16, %s15
      $region40: #{embedding_block_forward.1} parent=35 // pred_fallthru
        _
    $region36: #{embedding_block_forward.1} parent=5 // pred_fallthru
      _
    %p1230 = scmp.le.s32.totalorder 2, %s10
    // Predicated region
    $region41: #{embedding_block_forward.1} parent=5 // pred_check
      %p1231 = pneg %p1230
    $region42: #{embedding_block_forward.1} parent=5 // pred_check_branch
      %1233 = sbr.rel (%p1231) target = $region44
    $region43: #{embedding_block_forward.1} parent=5 // pred_region
      %s1234 = ssub.s32 %s10, 2
      // Predicated region
      $region45: #{embedding_block_forward.1} parent=43 // pred_check
        %p1235 = pneg %p128
      $region46: #{embedding_block_forward.1} parent=43 // pred_check_branch
        %1237 = sbr.rel (%p1235) target = $region48
      $region47: #{embedding_block_forward.1} parent=43 // pred_region
        %s1238 = smul.u32 16, %s16
        %p1239 = scmp.lt.s32.totalorder %s1238, 127
        %s1240 = scalar_select %p1239, %s1238, 127
        %s1241 = smul.addr %s1240, 8
        %s1242 = scalar_lea.vmem %s4, %s1241
      $region48: #{embedding_block_forward.1} parent=43 // pred_fallthru
        _
    $region44: #{embedding_block_forward.1} parent=5 // pred_fallthru
      _
  $region6: #{embedding_block_forward.1} parent=0 // loop_footer
    %s14 = sadd.s32 1, %s10
  $region7: #{embedding_block_forward.1} parent=0 // loop_footer_branch
    %9 = sbr.rel target = $region3
  $region8: #{embedding_block_forward.1} parent=0 // loop_exit
    _

</llo_original>
